<compile_context>
chip_gen: v5e
topology: v5e:2x2
jax: 0.10.0
libtpu: 0.0.40
codegen_flags: <defaults>
</compile_context>

<pallas_src>
import jax
import jax.numpy as jnp
from jax.experimental import pallas as pl
from jax.experimental.pallas import tpu as pltpu


def _copy_kernel(x_ref, o_ref):
    # Pure streaming copy of one lane-dense (block_rows, LANE) tile.
    o_ref[...] = x_ref[...]


def _largest_divisor_leq(n: int, cap: int, mult: int):
    """Largest d <= cap with n % d == 0 and d % mult == 0, or None."""
    d = (cap // mult) * mult
    while d >= mult:
        if n % d == 0:
            return d
        d -= mult
    return None


def flatten_layer(x: jax.Array) -> jax.Array:
    """Pallas equivalent of FlattenLayer.forward: x.view(x.shape[0], -1)."""
    n = x.shape[0]
    d = 1
    for s in x.shape[1:]:
        d *= s
    total = n * d
    itemsize = jnp.dtype(x.dtype).itemsize

    # Sublane packing multiple per dtype (f32 -> 8, bf16 -> 16, int8 -> 32).
    sub_mult = max(8, 32 // itemsize)

    # Lane width: largest power-of-two multiple of 128 that exactly divides
    # the element count, so the flat->slab reshape is metadata-only.
    lane = None
    for cand in (1024, 512, 256, 128):
        if total % cand == 0:
            lane = cand
            break
    if lane is None:
        # TODO(synk): element counts not divisible by 128 have no zero-copy
        # lane-dense presentation; a pad+copy kernel would only add HBM
        # traffic, so return the (production-correct) metadata-only reshape.
        return x.reshape(n, d)

    rows = total // lane

    # ~4 MiB blocks: 2 specs x 2 pipeline buffers = ~16 MiB VMEM, covered by
    # the explicit 32 MiB limit below on every generation, and big enough to
    # amortize per-grid-step overhead on fast-HBM parts (v7x).
    target_block_bytes = 4 << 20
    max_rows_bytes = max(
        sub_mult,
        (target_block_bytes // (lane * itemsize)) // sub_mult * sub_mult,
    )
    block_rows = min(rows, max_rows_bytes)

    # Keep >= ~4 grid steps on inputs big enough to split, so v7x's two
    # TensorCores (grid axis marked "parallel") each get a balanced share.
    if rows >= 4 * sub_mult:
        quarter = max(sub_mult, (rows // 4) // sub_mult * sub_mult)
        block_rows = min(block_rows, quarter)

    # Prefer a block_rows that divides rows: every block stays a full
    # unmasked lane-dense write (no clamped/masked tail block).
    if block_rows < rows and rows % block_rows != 0:
        snapped = _largest_divisor_leq(rows, block_rows, sub_mult)
        if snapped is not None:
            block_rows = snapped

    grid = (pl.cdiv(rows, block_rows),)

    # Metadata-only reshape of the contiguous tensor into the flat slab.
    x2d = x.reshape(rows, lane)

    out2d = pl.pallas_call(
        _copy_kernel,
        out_shape=jax.ShapeDtypeStruct((rows, lane), x.dtype),
        grid_spec=pltpu.PrefetchScalarGridSpec(
            num_scalar_prefetch=0,
            grid=grid,
            in_specs=[pl.BlockSpec((block_rows, lane), lambda i: (i, 0))],
            out_specs=pl.BlockSpec((block_rows, lane), lambda i: (i, 0)),
        ),
        compiler_params=pltpu.CompilerParams(
            dimension_semantics=("parallel",),
            # 4x block (~16 MiB) + headroom; <= physical VMEM on v5e/v6e/v7x.
            vmem_limit_bytes=32 << 20,
        ),
        cost_estimate=pl.CostEstimate(
            flops=0,
            transcendentals=0,
            bytes_accessed=2 * total * itemsize,
        ),
    )(x2d)

    # Metadata-only reshape back to the (N, D) flatten result.
    return out2d.reshape(n, d)


if __name__ == "__main__":
    key = jax.random.PRNGKey(0)

    # Small NCHW conv-feature-map input (single full-extent block).
    N, C, H, W = 2, 4, 16, 16
    x = jax.random.uniform(key, (N, C, H, W), dtype=jnp.float32)
    y = jax.block_until_ready(flatten_layer(x))
    y_ref = x.reshape(N, C * H * W)
    assert y.shape == (N, C * H * W), y.shape
    assert y.dtype == x.dtype
    assert jnp.array_equal(y, y_ref), "flatten mismatch (small)"

    # The tutorial's own shape (1, 1, 224, 224): multi-step grid path.
    x2 = jax.random.uniform(jax.random.PRNGKey(0), (1, 1, 224, 224),
                            dtype=jnp.float32)
    y2 = jax.block_until_ready(flatten_layer(x2))
    assert jnp.array_equal(y2, x2.reshape(1, 224 * 224)), "flatten mismatch (224)"

    print("KERNEL_OK")
</pallas_src>

<mosaic_0001>
module attributes {stable_mosaic.version = 11 : i64} {
  func.func @_copy_kernel(%arg0: i32, %arg1: memref<2x1024xf32, #tpu.memory_space<vmem>>, %arg2: memref<2x1024xf32, #tpu.memory_space<vmem>>) attributes {dimension_semantics = [#tpu.dimension_semantics<parallel>], iteration_bounds = array<i64: 1>, scalar_prefetch = 0 : i64, scratch_operands = 0 : i64, tpu.core_type = #tpu.core_type<tc>, window_params = [{transform_indices = @transform_0, window_bounds = array<i64: 2, 1024>}, {transform_indices = @transform_1, window_bounds = array<i64: 2, 1024>}]} {
    %c0 = arith.constant 0 : index
    %c0_0 = arith.constant 0 : index
    %0 = vector.load %arg1[%c0, %c0_0] : memref<2x1024xf32, #tpu.memory_space<vmem>>, vector<2x1024xf32>
    %c0_1 = arith.constant 0 : index
    %c0_2 = arith.constant 0 : index
    %1 = vector.load %arg2[%c0_1, %c0_2] : memref<2x1024xf32, #tpu.memory_space<vmem>>, vector<2x1024xf32>
    tpu.vector_store %arg2[%c0_1, %c0_2], %0 {strides = array<i32>} : memref<2x1024xf32, #tpu.memory_space<vmem>>, vector<2x1024xf32>,
    return
  }
  func.func @transform_0(%arg0: i32) -> (i32, i32) {
    %c0_i32 = arith.constant 0 : i32
    %c0_i32_0 = arith.constant 0 : i32
    return %arg0, %c0_i32 : i32, i32
  }
  func.func @transform_1(%arg0: i32) -> (i32, i32) {
    %c0_i32 = arith.constant 0 : i32
    %c0_i32_0 = arith.constant 0 : i32
    return %arg0, %c0_i32 : i32, i32
  }
}

</mosaic_0001>

<llo_original>
// kernel: tpu_custom_call.1
$region0: #{tpu_custom_call.1}
  #allocation0 [shape = 'u32[]', space=smem, size = 0x4, offset = 0x4, fixed_abs, tag = 'smem constant byte address 0x4 - core index']
  #allocation1 [shape = 'u32[72,128]{1,0:T(1,128)}', space=vmem, size = 0x9000, scoped, tag = 'internal scratch']
  %s0 = inlined_call_operand.hbm [shape: f32[2,1024], index: 0, kind: input, shape index: {}]
  %s1 = inlined_call_operand.hbm [shape: f32[2,1024], index: 1, kind: output, shape index: {}]
  %s2 = sld [smem:[#allocation0]]
  $region18: #{tpu_custom_call.1} parent=0
    _
  %s4 = ssub.s32 1, %s2
  %s5 = scalar_select 0, %s4, %s2
  $region1: #{tpu_custom_call.1} parent=0
    #allocation2 [shape = 'u8[8192]{0}', space=vmem, size = 0x2000, scoped, tag = 'input window, operand 0, single buffered']
    #allocation3 [shape = 's32[1]{0}', space=sflag, size = 0x4, scoped, tag = 'scoped memory for tpu_custom_call.1']
    #allocation4 [shape = 's32[1]{0}', space=sflag, size = 0x4, scoped, tag = 'scoped memory for tpu_custom_call.1']
    #allocation5 [shape = 'u8[8192]{0}', space=vmem, size = 0x2000, scoped, tag = 'output window, operand 0, single buffered']
    %6 = vsyncpa [#allocation3], 0
    %7 = vsyncpa [#allocation4], 0
    // Predicated region
    $region2: #{tpu_custom_call.1} parent=1 // pred_check
      _
    $region3: #{tpu_custom_call.1} parent=1 // pred_check_branch
      %9 = sbr.rel (0) target = $region5
    $region4: #{tpu_custom_call.1} parent=1 // pred_region
      %11 = vsyncadd [#allocation3], 0
      %s13 = sshll.u32 %s0, 4
      %s14 = int_to_ptr.hbm [resolvable:$true] %s13
      %s15 = sshll.u32 [#allocation2], 4
      %s16 = int_to_ptr.vmem [resolvable:$true] %s15
      %18 = dma.hbm_to_vmem [thread:$0]  %s14, 256, %s16, [#allocation3]
    $region5: #{tpu_custom_call.1} parent=1 // pred_fallthru
      _
    // Predicated region
    $region6: #{tpu_custom_call.1} parent=1 // pred_check
      _
    $region7: #{tpu_custom_call.1} parent=1 // pred_check_branch
      %20 = sbr.rel (0) target = $region9
    $region8: #{tpu_custom_call.1} parent=1 // pred_region
      %22 = dma.done [#allocation3], 256
    $region9: #{tpu_custom_call.1} parent=1 // pred_fallthru
      _
    %v23 = vld [vmem:[#allocation2] sm:$0xff]
    %v24 = vld [vmem:[#allocation2 + $0x8] sm:$0xff]
    %25 = vst [vmem:[#allocation5] sm:$0xff] %v23
    %26 = vst [vmem:[#allocation5 + $0x8] sm:$0xff] %v24
    // Predicated region
    $region10: #{tpu_custom_call.1} parent=1 // pred_check
      _
    $region11: #{tpu_custom_call.1} parent=1 // pred_check_branch
      %28 = sbr.rel (0) target = $region13
    $region12: #{tpu_custom_call.1} parent=1 // pred_region
      %30 = vsyncadd [#allocation4], 0
      %s32 = sshll.u32 [#allocation5], 4
      %s33 = int_to_ptr.vmem [resolvable:$true] %s32
      %s34 = sshll.u32 %s1, 4
      %s35 = int_to_ptr.hbm [resolvable:$true] %s34
      %37 = dma.vmem_to_hbm [thread:$0]  %s33, 256, %s35, [#allocation4]
    $region13: #{tpu_custom_call.1} parent=1 // pred_fallthru
      _
    // Predicated region
    $region14: #{tpu_custom_call.1} parent=1 // pred_check
      _
    $region15: #{tpu_custom_call.1} parent=1 // pred_check_branch
      %39 = sbr.rel (0) target = $region17
    $region16: #{tpu_custom_call.1} parent=1 // pred_region
      %41 = dma.done [#allocation4], 256
    $region17: #{tpu_custom_call.1} parent=1 // pred_fallthru
      _
    %42 = vsyncpa [#allocation3], 1
    %43 = vsyncpa [#allocation4], 1

</llo_original>
